<compile_context>
chip_gen: v6e
topology: v6e:2x2x1
jax: 0.10.0
libtpu: 0.0.40
codegen_flags: <defaults>
</compile_context>

<pallas_src>
import jax
import jax.numpy as jnp
from jax.experimental import pallas as pl
from jax.experimental.pallas import tpu as pltpu


def _round_up(v, m):
    return ((v + m - 1) // m) * m


def _step_vmem_bytes(tb, in_size, out_size, mm_bytes):
    """Rough per-grid-step VMEM footprint (double-buffered pipeline buffers)."""
    xs = 3 * tb * in_size * mm_bytes          # fused anchor|pos|neg activations
    wt = in_size * out_size * mm_bytes        # weight (same block every step)
    ws = 3 * tb * out_size * 4                # per-participant slopes
    emb = 3 * tb * out_size * 4               # scaled embedding output
    small = 3 * tb * 4                        # temp + mask + nll
    return 2 * (xs + ws + emb + small) + 2 * wt


def _choose_block_rows(T, in_size, out_size, mm_bytes, row_align, cap, budget):
    tb = min(_round_up(cap, row_align), _round_up(max(T, row_align), row_align))
    while tb > row_align and _step_vmem_bytes(tb, in_size, out_size,
                                              mm_bytes) > budget:
        tb = _round_up(max(tb // 2, row_align), row_align)
    return tb


def _combined_kernel(xs_ref, ws_ref, wt_ref, temp_ref, mask_ref,
                     emb_ref, nll_ref):
    """SPoSE_ID_Random forward + odd-one-out 'dot' similarities + scaled
    softmax-NLL per-row partials for one block of triplets (anchor-major)."""
    _, tb, in_size = xs_ref.shape
    out_size = ws_ref.shape[-1]

    # Single fused MXU pass over [anchor; positive; negative] rows.
    x2d = xs_ref[...].reshape(3 * tb, in_size)
    y = jnp.dot(x2d, wt_ref[...], preferred_element_type=jnp.float32)
    scaled = ws_ref[...] * y.reshape(3, tb, out_size)       # w_i * fc(x)
    emb_ref[...] = scaled

    anchor, positive, negative = scaled[0], scaled[1], scaled[2]

    # odd-one-out similarities, distance_metric == 'dot'
    sim_ap = jnp.sum(anchor * positive, axis=-1, keepdims=True)    # (tb, 1)
    sim_an = jnp.sum(anchor * negative, axis=-1, keepdims=True)
    sim_pn = jnp.sum(positive * negative, axis=-1, keepdims=True)

    # temperature scaling (model2 output, already exp()'d in the wrapper):
    # one EUP reciprocal + 3 multiplies instead of 3 VPU divides.
    inv_temp = pl.reciprocal(temp_ref[...], approx=True)
    s0 = sim_ap * inv_temp
    s1 = sim_an * inv_temp
    s2 = sim_pn * inv_temp

    # per-row NLL: -log softmax([s0, s1, s2])[:, 0] = logsumexp - s0
    m = jnp.maximum(jnp.maximum(s0, s1), s2)
    lse = m + jnp.log(jnp.exp(s0 - m) + jnp.exp(s1 - m) + jnp.exp(s2 - m))
    nll_ref[...] = (lse - s0) * mask_ref[...]    # padded rows masked to zero


def init_params(key, in_size, out_size, num_participants):
    """Deterministic replication of CombinedModel.__init__ parameter shapes."""
    k1, k2, k3 = jax.random.split(key, 3)
    fc_w = 0.1 + 0.01 * jax.random.normal(k1, (out_size, in_size), jnp.float32)
    slopes = 0.5 + 0.15 * jax.random.normal(
        k2, (num_participants, out_size), jnp.float32)
    temps = -2.3 + 0.5 * jax.random.normal(
        k3, (num_participants, 1), jnp.float32)
    return dict(
        fc_w_t=jnp.asarray(fc_w.T),   # nn.Linear weight pre-transposed ONCE (in, out)
        slopes=slopes,                # nn.Embedding(P, out)
        temps=temps,                  # nn.Embedding(P, 1)
        global_mean=jnp.ones((out_size,), jnp.float32),   # unused in forward
        global_std=jnp.ones((out_size,), jnp.float32),    # unused in forward
    )


def combined_model_forward(params, x, ids, distance_metric="dot",
                           block_rows=512, use_bf16=False):
    if distance_metric != "dot":
        # TODO(synk): 'euclidean' branch of ut.compute_similarities not
        # implemented (reference util source unavailable); only 'dot' here.
        raise NotImplementedError("only distance_metric='dot' is implemented")

    B, in_size = x.shape
    assert B % 3 == 0, "batch must be triplets (anchor, positive, negative)"
    T = B // 3
    wt = params["fc_w_t"]                     # (in, out), no per-call transpose
    out_size = wt.shape[1]

    # embedding gathers (small, data-dependent) stay in XLA
    w_i = jnp.take(params["slopes"], ids, axis=0)                  # (B, out)
    # matches PyTorch reference: temp = exp(individual_temps(id[::3]))
    temp = jnp.exp(jnp.take(params["temps"], ids[::3], axis=0))    # (T, 1)

    # one anchor-major permutation [A; P; N] replaces three strided gathers
    xs = jnp.transpose(x.reshape(T, 3, in_size), (1, 0, 2))        # (3, T, in)
    ws = jnp.transpose(w_i.reshape(T, 3, out_size), (1, 0, 2))     # (3, T, out)

    # tile the triplet axis; pad T so every block stays sublane-aligned
    mm_bytes = 2 if use_bf16 else 4
    row_align = 16 if use_bf16 else 8
    tb = _choose_block_rows(T, in_size, out_size, mm_bytes, row_align,
                            cap=block_rows, budget=24 << 20)  # fits v7x 64 MiB VMEM
    Tp = _round_up(max(T, tb), tb)
    nb = Tp // tb
    pad = Tp - T
    if pad:
        xs = jnp.pad(xs, ((0, 0), (0, pad), (0, 0)))
        ws = jnp.pad(ws, ((0, 0), (0, pad), (0, 0)))
        temp = jnp.pad(temp, ((0, pad), (0, 0)), constant_values=1.0)
    mask = (jnp.arange(Tp) < T).astype(jnp.float32)[:, None]       # (Tp, 1)

    if use_bf16:   # MXU runs bf16 at full rate; accumulation/elementwise stay f32
        xs = xs.astype(jnp.bfloat16)
        wt = wt.astype(jnp.bfloat16)

    vmem_limit = int(min(
        64 << 20,
        max(16 << 20,
            (3 * _step_vmem_bytes(tb, in_size, out_size, mm_bytes)) // 2)))

    emb, nll = pl.pallas_call(
        _combined_kernel,
        out_shape=(
            jax.ShapeDtypeStruct((3, Tp, out_size), jnp.float32),  # [a; p; n]
            jax.ShapeDtypeStruct((Tp, 1), jnp.float32),            # per-row NLL
        ),
        grid_spec=pltpu.PrefetchScalarGridSpec(
            num_scalar_prefetch=0,
            grid=(nb,),
            in_specs=[
                pl.BlockSpec((3, tb, in_size), lambda i: (0, i, 0)),
                pl.BlockSpec((3, tb, out_size), lambda i: (0, i, 0)),
                pl.BlockSpec((in_size, out_size), lambda i: (0, 0)),  # resident
                pl.BlockSpec((tb, 1), lambda i: (i, 0)),
                pl.BlockSpec((tb, 1), lambda i: (i, 0)),
            ],
            out_specs=[
                pl.BlockSpec((3, tb, out_size), lambda i: (0, i, 0)),
                pl.BlockSpec((tb, 1), lambda i: (i, 0)),
            ],
        ),
        compiler_params=pltpu.CompilerParams(
            dimension_semantics=("parallel",),   # v7x: shard blocks across 2 TCs
            vmem_limit_bytes=vmem_limit,
        ),
    )(xs, ws, wt, temp, mask)

    loss = jnp.sum(nll) / T
    anchor = emb[0, :T]
    positive = emb[1, :T]
    negative = emb[2, :T]
    return loss, anchor, positive, negative


if __name__ == "__main__":
    key = jax.random.PRNGKey(0)
    in_size, out_size, num_participants = 16, 32, 8
    B = 12  # 4 triplets

    kp, kx, kid = jax.random.split(key, 3)
    params = init_params(kp, in_size, out_size, num_participants)
    x = jax.random.normal(kx, (B, in_size), jnp.float32)
    # participant id is constant within a triplet (forward uses id[::3])
    trip_ids = jax.random.randint(kid, (B // 3,), 0, num_participants,
                                  dtype=jnp.int32)
    ids = jnp.repeat(trip_ids, 3)

    loss, anchor, positive, negative = combined_model_forward(
        params, x, ids, distance_metric="dot")
    jax.block_until_ready((loss, anchor, positive, negative))

    # also exercise the bf16 MXU path (v6e/v7x full-rate matmul)
    loss_bf16, _, _, _ = combined_model_forward(
        params, x, ids, distance_metric="dot", use_bf16=True)
    jax.block_until_ready(loss_bf16)

    print("KERNEL_OK")
</pallas_src>

<mosaic_0001>
module attributes {stable_mosaic.version = 11 : i64} {
  func.func @_combined_kernel(%arg0: i32, %arg1: memref<3x8x16xf32, #tpu.memory_space<vmem>>, %arg2: memref<3x8x32xf32, #tpu.memory_space<vmem>>, %arg3: memref<16x32xf32, #tpu.memory_space<vmem>>, %arg4: memref<8x1xf32, #tpu.memory_space<vmem>>, %arg5: memref<8x1xf32, #tpu.memory_space<vmem>>, %arg6: memref<3x8x32xf32, #tpu.memory_space<vmem>>, %arg7: memref<8x1xf32, #tpu.memory_space<vmem>>) attributes {dimension_semantics = [#tpu.dimension_semantics<parallel>], iteration_bounds = array<i64: 1>, scalar_prefetch = 0 : i64, scratch_operands = 0 : i64, tpu.core_type = #tpu.core_type<tc>, window_params = [{transform_indices = @transform_0, window_bounds = array<i64: 3, 8, 16>}, {transform_indices = @transform_1, window_bounds = array<i64: 3, 8, 32>}, {pipeline_mode = #tpu.pipeline_mode<synchronous>, transform_indices = @transform_2, window_bounds = array<i64: 16, 32>}, {transform_indices = @transform_3, window_bounds = array<i64: 8, 1>}, {transform_indices = @transform_4, window_bounds = array<i64: 8, 1>}, {transform_indices = @transform_5, window_bounds = array<i64: 3, 8, 32>}, {transform_indices = @transform_6, window_bounds = array<i64: 8, 1>}]} {
    %c0 = arith.constant 0 : index
    %c0_0 = arith.constant 0 : index
    %c0_1 = arith.constant 0 : index
    %0 = vector.load %arg1[%c0, %c0_0, %c0_1] : memref<3x8x16xf32, #tpu.memory_space<vmem>>, vector<3x8x16xf32>
    %1 = vector.shape_cast %0 : vector<3x8x16xf32> to vector<24x16xf32>
    %c0_2 = arith.constant 0 : index
    %c0_3 = arith.constant 0 : index
    %2 = vector.load %arg3[%c0_2, %c0_3] : memref<16x32xf32, #tpu.memory_space<vmem>>, vector<16x32xf32>
    %cst = arith.constant dense<0.000000e+00> : vector<24x32xf32>
    %3 = tpu.matmul %1, %2, %cst {dimension_numbers = #tpu.dot_dimension_numbers<[1], [0], [0], [1], [0, 0, 1, 1], [], []>} : vector<24x16xf32>, vector<16x32xf32>, vector<24x32xf32> -> vector<24x32xf32>
    %c0_4 = arith.constant 0 : index
    %c0_5 = arith.constant 0 : index
    %c0_6 = arith.constant 0 : index
    %4 = vector.load %arg2[%c0_4, %c0_5, %c0_6] : memref<3x8x32xf32, #tpu.memory_space<vmem>>, vector<3x8x32xf32>
    %5 = vector.shape_cast %3 : vector<24x32xf32> to vector<3x8x32xf32>
    %6 = arith.mulf %4, %5 : vector<3x8x32xf32>
    %c0_7 = arith.constant 0 : index
    %c0_8 = arith.constant 0 : index
    %c0_9 = arith.constant 0 : index
    %7 = vector.load %arg6[%c0_7, %c0_8, %c0_9] : memref<3x8x32xf32, #tpu.memory_space<vmem>>, vector<3x8x32xf32>
    tpu.vector_store %arg6[%c0_7, %c0_8, %c0_9], %6 {strides = array<i32>} : memref<3x8x32xf32, #tpu.memory_space<vmem>>, vector<3x8x32xf32>,
    %8 = vector.extract_strided_slice %6 {offsets = [0, 0, 0], sizes = [1, 8, 32], strides = [1, 1, 1]} : vector<3x8x32xf32> to vector<1x8x32xf32>
    %9 = vector.shape_cast %8 : vector<1x8x32xf32> to vector<8x32xf32>
    %10 = vector.extract_strided_slice %6 {offsets = [1, 0, 0], sizes = [1, 8, 32], strides = [1, 1, 1]} : vector<3x8x32xf32> to vector<1x8x32xf32>
    %11 = vector.shape_cast %10 : vector<1x8x32xf32> to vector<8x32xf32>
    %12 = vector.extract_strided_slice %6 {offsets = [2, 0, 0], sizes = [1, 8, 32], strides = [1, 1, 1]} : vector<3x8x32xf32> to vector<1x8x32xf32>
    %13 = vector.shape_cast %12 : vector<1x8x32xf32> to vector<8x32xf32>
    %14 = arith.mulf %9, %11 : vector<8x32xf32>
    %cst_10 = arith.constant dense<0.000000e+00> : vector<8xf32>
    %15 = vector.multi_reduction <add>, %14, %cst_10 [1] : vector<8x32xf32> to vector<8xf32>
    %16 = vector.shape_cast %15 : vector<8xf32> to vector<8x1xf32>
    %17 = arith.mulf %9, %13 : vector<8x32xf32>
    %cst_11 = arith.constant dense<0.000000e+00> : vector<8xf32>
    %18 = vector.multi_reduction <add>, %17, %cst_11 [1] : vector<8x32xf32> to vector<8xf32>
    %19 = vector.shape_cast %18 : vector<8xf32> to vector<8x1xf32>
    %20 = arith.mulf %11, %13 : vector<8x32xf32>
    %cst_12 = arith.constant dense<0.000000e+00> : vector<8xf32>
    %21 = vector.multi_reduction <add>, %20, %cst_12 [1] : vector<8x32xf32> to vector<8xf32>
    %22 = vector.shape_cast %21 : vector<8xf32> to vector<8x1xf32>
    %c0_13 = arith.constant 0 : index
    %c0_14 = arith.constant 0 : index
    %23 = vector.load %arg4[%c0_13, %c0_14] : memref<8x1xf32, #tpu.memory_space<vmem>>, vector<8x1xf32>
    %24 = tpu.reciprocal %23 {approx = true} : vector<8x1xf32> -> vector<8x1xf32>
    %25 = arith.mulf %16, %24 : vector<8x1xf32>
    %26 = arith.mulf %19, %24 : vector<8x1xf32>
    %27 = arith.mulf %22, %24 : vector<8x1xf32>
    %28 = arith.maximumf %25, %26 : vector<8x1xf32>
    %29 = arith.maximumf %28, %27 : vector<8x1xf32>
    %30 = arith.subf %25, %29 : vector<8x1xf32>
    %31 = math.exp %30 : vector<8x1xf32>
    %32 = arith.subf %26, %29 : vector<8x1xf32>
    %33 = math.exp %32 : vector<8x1xf32>
    %34 = arith.addf %31, %33 : vector<8x1xf32>
    %35 = arith.subf %27, %29 : vector<8x1xf32>
    %36 = math.exp %35 : vector<8x1xf32>
    %37 = arith.addf %34, %36 : vector<8x1xf32>
    %38 = math.log %37 : vector<8x1xf32>
    %39 = arith.addf %29, %38 : vector<8x1xf32>
    %40 = arith.subf %39, %25 : vector<8x1xf32>
    %c0_15 = arith.constant 0 : index
    %c0_16 = arith.constant 0 : index
    %41 = vector.load %arg5[%c0_15, %c0_16] : memref<8x1xf32, #tpu.memory_space<vmem>>, vector<8x1xf32>
    %42 = arith.mulf %40, %41 : vector<8x1xf32>
    %c0_17 = arith.constant 0 : index
    %c0_18 = arith.constant 0 : index
    %43 = vector.load %arg7[%c0_17, %c0_18] : memref<8x1xf32, #tpu.memory_space<vmem>>, vector<8x1xf32>
    tpu.vector_store %arg7[%c0_17, %c0_18], %42 {strides = array<i32>} : memref<8x1xf32, #tpu.memory_space<vmem>>, vector<8x1xf32>,
    return
  }
  func.func @transform_0(%arg0: i32) -> (i32, i32, i32) {
    %c0_i32 = arith.constant 0 : i32
    %c0_i32_0 = arith.constant 0 : i32
    %c0_i32_1 = arith.constant 0 : i32
    return %c0_i32, %arg0, %c0_i32_0 : i32, i32, i32
  }
  func.func @transform_1(%arg0: i32) -> (i32, i32, i32) {
    %c0_i32 = arith.constant 0 : i32
    %c0_i32_0 = arith.constant 0 : i32
    %c0_i32_1 = arith.constant 0 : i32
    return %c0_i32, %arg0, %c0_i32_0 : i32, i32, i32
  }
  func.func @transform_2(%arg0: i32) -> (i32, i32) {
    %c0_i32 = arith.constant 0 : i32
    %c0_i32_0 = arith.constant 0 : i32
    %c0_i32_1 = arith.constant 0 : i32
    return %c0_i32, %c0_i32_0 : i32, i32
  }
  func.func @transform_3(%arg0: i32) -> (i32, i32) {
    %c0_i32 = arith.constant 0 : i32
    %c0_i32_0 = arith.constant 0 : i32
    return %arg0, %c0_i32 : i32, i32
  }
  func.func @transform_4(%arg0: i32) -> (i32, i32) {
    %c0_i32 = arith.constant 0 : i32
    %c0_i32_0 = arith.constant 0 : i32
    return %arg0, %c0_i32 : i32, i32
  }
  func.func @transform_5(%arg0: i32) -> (i32, i32, i32) {
    %c0_i32 = arith.constant 0 : i32
    %c0_i32_0 = arith.constant 0 : i32
    %c0_i32_1 = arith.constant 0 : i32
    return %c0_i32, %arg0, %c0_i32_0 : i32, i32, i32
  }
  func.func @transform_6(%arg0: i32) -> (i32, i32) {
    %c0_i32 = arith.constant 0 : i32
    %c0_i32_0 = arith.constant 0 : i32
    return %arg0, %c0_i32 : i32, i32
  }
}

</mosaic_0001>

<llo_original>
// kernel: tpu_custom_call.1
$region0: #{tpu_custom_call.1}
  #allocation0 [shape = 'u32[]', space=smem, size = 0x4, offset = 0x4, fixed_abs, tag = 'smem constant byte address 0x4 - core index']
  #allocation1 [shape = 'u32[144,128]{1,0:T(1,128)}', space=vmem, size = 0x12000, scoped, tag = 'internal scratch']
  %s0 = inlined_call_operand.hbm [shape: f32[3,8,16], index: 0, kind: input, shape index: {}]
  %s1 = inlined_call_operand.hbm [shape: f32[3,8,32], index: 1, kind: input, shape index: {}]
  %s2 = inlined_call_operand.vmem [shape: f32[16,32], index: 2, kind: input, shape index: {}]
  %s3 = inlined_call_operand.vmem [shape: f32[8,1], index: 3, kind: input, shape index: {}]
  %s4 = inlined_call_operand.vmem [shape: f32[8,1], index: 4, kind: input, shape index: {}]
  %s5 = inlined_call_operand.hbm [shape: f32[3,8,32], index: 5, kind: output, shape index: {0}]
  %s6 = inlined_call_operand.vmem [shape: f32[8,1], index: 6, kind: output, shape index: {1}]
  %7 = xla_tuple %s5, %s6
  %s8 = sld [smem:[#allocation0]]
  $region46: #{tpu_custom_call.1} parent=0
    _
  %s10 = ssub.s32 1, %s8
  %s11 = scalar_select 0, %s10, %s8
  $region1: #{tpu_custom_call.1} parent=0
    #allocation2 [shape = 'u8[12288]{0}', space=vmem, size = 0x3000, scoped, tag = 'input window, operand 0, single buffered']
    #allocation3 [shape = 's32[1]{0}', space=sflag, size = 0x4, scoped, tag = 'scoped memory for tpu_custom_call.1']
    #allocation4 [shape = 's32[1]{0}', space=sflag, size = 0x4, scoped, tag = 'scoped memory for tpu_custom_call.1']
    #allocation5 [shape = 'u8[12288]{0}', space=vmem, size = 0x3000, scoped, tag = 'input window, operand 1, single buffered']
    #allocation6 [shape = 's32[1]{0}', space=sflag, size = 0x4, scoped, tag = 'scoped memory for tpu_custom_call.1']
    #allocation7 [shape = 'u8[12288]{0}', space=vmem, size = 0x3000, scoped, tag = 'output window, operand 0, single buffered']
    %12 = vsyncpa [#allocation3], 0
    %13 = vsyncpa [#allocation6], 0
    %14 = vsyncpa [#allocation4], 0
    // Predicated region
    $region2: #{tpu_custom_call.1} parent=1 // pred_check
      _
    $region3: #{tpu_custom_call.1} parent=1 // pred_check_branch
      %16 = sbr.rel (0) target = $region5
    $region4: #{tpu_custom_call.1} parent=1 // pred_region
      %s18 = ssub.s32 384, 384
      %19 = vsyncadd [#allocation3], %s18
      %s20 = sshll.u32 [#allocation2], 4
      %s21 = int_to_ptr.vmem [resolvable:$true] %s20
      %26 = dma.hbm_to_vmem [thread:$0]  %s0, 384, %s21, [#allocation3], 128, 128, 8
    $region5: #{tpu_custom_call.1} parent=1 // pred_fallthru
      _
    // Predicated region
    $region6: #{tpu_custom_call.1} parent=1 // pred_check
      _
    $region7: #{tpu_custom_call.1} parent=1 // pred_check_branch
      %28 = sbr.rel (0) target = $region9
    $region8: #{tpu_custom_call.1} parent=1 // pred_region
      %s30 = ssub.s32 384, 384
      %31 = vsyncadd [#allocation6], %s30
      %s32 = sshll.u32 [#allocation5], 4
      %s33 = int_to_ptr.vmem [resolvable:$true] %s32
      %38 = dma.hbm_to_vmem [thread:$0]  %s1, 384, %s33, [#allocation6], 128, 128, 8
    $region9: #{tpu_custom_call.1} parent=1 // pred_fallthru
      _
    // Predicated region
    $region10: #{tpu_custom_call.1} parent=1 // pred_check
      _
    $region11: #{tpu_custom_call.1} parent=1 // pred_check_branch
      %40 = sbr.rel (0) target = $region13
    $region12: #{tpu_custom_call.1} parent=1 // pred_region
      _
    $region13: #{tpu_custom_call.1} parent=1 // pred_fallthru
      _
    // Predicated region
    $region14: #{tpu_custom_call.1} parent=1 // pred_check
      _
    $region15: #{tpu_custom_call.1} parent=1 // pred_check_branch
      %42 = sbr.rel (0) target = $region17
    $region16: #{tpu_custom_call.1} parent=1 // pred_region
      _
    $region17: #{tpu_custom_call.1} parent=1 // pred_fallthru
      _
    // Predicated region
    $region18: #{tpu_custom_call.1} parent=1 // pred_check
      _
    $region19: #{tpu_custom_call.1} parent=1 // pred_check_branch
      %44 = sbr.rel (0) target = $region21
    $region20: #{tpu_custom_call.1} parent=1 // pred_region
      _
    $region21: #{tpu_custom_call.1} parent=1 // pred_fallthru
      _
    // Predicated region
    $region22: #{tpu_custom_call.1} parent=1 // pred_check
      _
    $region23: #{tpu_custom_call.1} parent=1 // pred_check_branch
      %46 = sbr.rel (0) target = $region25
    $region24: #{tpu_custom_call.1} parent=1 // pred_region
      %47 = dma.done [#allocation3], 384
    $region25: #{tpu_custom_call.1} parent=1 // pred_fallthru
      _
    // Predicated region
    $region26: #{tpu_custom_call.1} parent=1 // pred_check
      _
    $region27: #{tpu_custom_call.1} parent=1 // pred_check_branch
      %49 = sbr.rel (0) target = $region29
    $region28: #{tpu_custom_call.1} parent=1 // pred_region
      %50 = dma.done [#allocation6], 384
    $region29: #{tpu_custom_call.1} parent=1 // pred_fallthru
      _
    %v51 = vld [vmem:[#allocation2] sm:$0xff]
    %v52 = vld [vmem:[#allocation2 + $0x8] sm:$0xff]
    %v53 = vld [vmem:[#allocation2 + $0x10] sm:$0xff]
    %v54 = vld [vmem:[%s2] sm:$0xff]
    %v55 = vld [vmem:[%s2 + $0x8] sm:$0xff]
    %vm56 = vcmask 130048
    %v58 = vsel %vm56, %v51, 0
    %v61 = vsel %vm56, %v52, 0
    %v64 = vsel %vm56, %v53, 0
    %66 = vmatprep.subr.mxu0 0.0
    %67 = vmatpush1.msra.mxu0 0.0
    %68 = vmatprep.subr.mxu0 0.0
    %69 = vmatpush1.msra.mxu0 0.0
    %70 = vmatprep.subr.mxu0 0.0
    %71 = vmatpush1.msra.mxu0 0.0
    %72 = vmatprep.subr.mxu0 0.0
    %73 = vmatpush1.msra.mxu0 0.0
    %74 = vmatprep.subr.mxu0 0.0
    %75 = vmatpush1.msra.mxu0 0.0
    %76 = vmatprep.subr.mxu0 0.0
    %77 = vmatpush1.msra.mxu0 0.0
    %78 = vmatprep.subr.mxu0 0.0
    %79 = vmatpush1.msra.mxu0 0.0
    %80 = vmatprep.subr.mxu0 0.0
    %81 = vmatpush1.msra.mxu0 0.0
    %82 = vmatprep.subr.mxu0 0.0
    %83 = vmatpush1.msra.mxu0 0.0
    %84 = vmatprep.subr.mxu0 0.0
    %85 = vmatpush1.msra.mxu0 0.0
    %86 = vmatprep.subr.mxu0 0.0
    %87 = vmatpush1.msra.mxu0 0.0
    %88 = vmatprep.subr.mxu0 0.0
    %89 = vmatpush1.msra.mxu0 0.0
    %90 = vmatprep.subr.mxu0 0.0
    %91 = vmatpush1.msra.mxu0 0.0
    %92 = vmatprep.subr.mxu0 0.0
    %93 = vmatpush1.msra.mxu0 0.0
    %94 = vmatprep.subr.mxu0 0.0
    %95 = vmatpush1.msra.mxu0 %v55
    %96 = vmatprep.subr.mxu0 0.0
    %97 = vmatpush1.msra.mxu0 %v54
    %98 = vmatprep.subr.mxu0 0.0
    %99 = vmatpush2.msra.mxu0 0.0
    %100 = vmatprep.subr.mxu0 0.0
    %101 = vmatpush2.msra.mxu0 0.0
    %102 = vmatprep.subr.mxu0 0.0
    %103 = vmatpush2.msra.mxu0 0.0
    %104 = vmatprep.subr.mxu0 0.0
    %105 = vmatpush2.msra.mxu0 0.0
    %106 = vmatprep.subr.mxu0 0.0
    %107 = vmatpush2.msra.mxu0 0.0
    %108 = vmatprep.subr.mxu0 0.0
    %109 = vmatpush2.msra.mxu0 0.0
    %110 = vmatprep.subr.mxu0 0.0
    %111 = vmatpush2.msra.mxu0 0.0
    %112 = vmatprep.subr.mxu0 0.0
    %113 = vmatpush2.msra.mxu0 0.0
    %114 = vmatprep.subr.mxu0 0.0
    %115 = vmatpush2.msra.mxu0 0.0
    %116 = vmatprep.subr.mxu0 0.0
    %117 = vmatpush2.msra.mxu0 0.0
    %118 = vmatprep.subr.mxu0 0.0
    %119 = vmatpush2.msra.mxu0 0.0
    %120 = vmatprep.subr.mxu0 0.0
    %121 = vmatpush2.msra.mxu0 0.0
    %122 = vmatprep.subr.mxu0 0.0
    %123 = vmatpush2.msra.mxu0 0.0
    %124 = vmatprep.subr.mxu0 0.0
    %125 = vmatpush2.msra.mxu0 0.0
    %126 = vmatprep.subr.mxu0 0.0
    %127 = vmatpush2.msra.mxu0 0.0
    %128 = vmatprep.subr.mxu0 0.0
    %129 = vmatpush2.msra.mxu0 0.0
    %130 = vmatprep.mubr.f32.mxu0 0.0
    %131 = vmatmul.mubr.f32.gmra.mxu0 %v58
    %v132 = vpop.f32.mrf.mxu0
    %v133 = vadd.f32 0.0, %v132
    %v134 = vpop.f32.mrf.mxu0
    %135 = vmatprep.mubr.f32.mxu0 0.0
    %136 = vmatmul.mubr.f32.gmra.mxu0 %v61
    %v137 = vpop.f32.mrf.mxu0
    %v138 = vadd.f32 0.0, %v137
    %v139 = vpop.f32.mrf.mxu0
    %140 = vmatprep.mubr.f32.mxu0 0.0
    %141 = vmatmul.mubr.f32.gmra.mxu0 %v64
    %v142 = vpop.f32.mrf.mxu0
    %v143 = vadd.f32 0.0, %v142
    %v144 = vpop.f32.mrf.mxu0
    %145 = vdwg.mxu0
    %v146 = vld [vmem:[#allocation5] sm:$0xff]
    %v147 = vld [vmem:[#allocation5 + $0x8] sm:$0xff]
    %v148 = vld [vmem:[#allocation5 + $0x10] sm:$0xff]
    %v149 = vmul.f32 %v146, %v133
    %v150 = vmul.f32 %v147, %v138
    %v151 = vmul.f32 %v148, %v143
    %vm152 = vcmask 261120
    %153 = vst.msk [vmem:[#allocation7] sm:$0xff] %vm152, %v149
    %154 = vst.msk [vmem:[#allocation7 + $0x8] sm:$0xff] %vm152, %v150
    %155 = vst.msk [vmem:[#allocation7 + $0x10] sm:$0xff] %vm152, %v151
    %v156 = vmul.f32 %v149, %v150
    %v157 = vsel %vm152, %v156, 0.0
    %158 = vadd.xlane.f32.xlu0 %v157
    %v159 = vpop.xlane.xlu0 %158
    %v160 = vmul.f32 %v149, %v151
    %v161 = vsel %vm152, %v160, 0.0
    %162 = vadd.xlane.f32.xlu0 %v161
    %v163 = vpop.xlane.xlu0 %162
    %v164 = vmul.f32 %v150, %v151
    %v165 = vsel %vm152, %v164, 0.0
    %166 = vadd.xlane.f32.xlu0 %v165
    %v167 = vpop.xlane.xlu0 %166
    %v168 = vld [vmem:[%s3] sm:$0xff]
    %v169 = vrcp.pop %v168
    %v170 = vmul.f32 %v159, %v169
    %v171 = vmul.f32 %v163, %v169
    %v172 = vmul.f32 %v167, %v169
    %v173 = vmax.f32 %v170, %v171
    %v174 = vmax.f32 %v173, %v172
    %v175 = vsub.f32 %v170, %v174
    %v176 = vmul.f32 %v175, 1.442695
    %v177 = vpow.pop %v176
    %v178 = vsub.f32 %v171, %v174
    %v179 = vmul.f32 %v178, 1.442695
    %v180 = vpow.pop %v179
    %v181 = vadd.f32 %v177, %v180
    %v182 = vsub.f32 %v172, %v174
    %v183 = vmul.f32 %v182, 1.442695
    %v184 = vpow.pop %v183
    %v185 = vadd.f32 %v181, %v184
    %v186 = vlog2.pop %v185
    %v187 = vmul.f32 %v186, 0.6931472
    %v188 = vadd.f32 %v174, %v187
    %v189 = vsub.f32 %v188, %v170
    %v190 = vld [vmem:[%s4] sm:$0xff]
    %v191 = vmul.f32 %v189, %v190
    %vm192 = vcmask 7168
    %193 = vst.msk [vmem:[%s6] sm:$0xff] %vm192, %v191
    // Predicated region
    $region30: #{tpu_custom_call.1} parent=1 // pred_check
      _
    $region31: #{tpu_custom_call.1} parent=1 // pred_check_branch
      %195 = sbr.rel (0) target = $region33
    $region32: #{tpu_custom_call.1} parent=1 // pred_region
      %s197 = ssub.s32 384, 384
      %198 = vsyncadd [#allocation4], %s197
      %s199 = sshll.u32 [#allocation7], 4
      %s200 = int_to_ptr.vmem [resolvable:$true] %s199
      %205 = dma.vmem_to_hbm [thread:$0]  %s200, 384, %s5, [#allocation4], 128, 128, 8
    $region33: #{tpu_custom_call.1} parent=1 // pred_fallthru
      _
    // Predicated region
    $region34: #{tpu_custom_call.1} parent=1 // pred_check
      _
    $region35: #{tpu_custom_call.1} parent=1 // pred_check_branch
      %207 = sbr.rel (0) target = $region37
    $region36: #{tpu_custom_call.1} parent=1 // pred_region
      _
    $region37: #{tpu_custom_call.1} parent=1 // pred_fallthru
      _
    // Predicated region
    $region38: #{tpu_custom_call.1} parent=1 // pred_check
      _
    $region39: #{tpu_custom_call.1} parent=1 // pred_check_branch
      %209 = sbr.rel (0) target = $region41
    $region40: #{tpu_custom_call.1} parent=1 // pred_region
      %210 = dma.done [#allocation4], 384
    $region41: #{tpu_custom_call.1} parent=1 // pred_fallthru
      _
    // Predicated region
    $region42: #{tpu_custom_call.1} parent=1 // pred_check
      _
    $region43: #{tpu_custom_call.1} parent=1 // pred_check_branch
      %212 = sbr.rel (0) target = $region45
    $region44: #{tpu_custom_call.1} parent=1 // pred_region
      _
    $region45: #{tpu_custom_call.1} parent=1 // pred_fallthru
      _
    %213 = vsyncpa [#allocation3], 1
    %214 = vsyncpa [#allocation6], 1
    %215 = vsyncpa [#allocation4], 1

</llo_original>
